<compile_context>
chip_gen: v6e
topology: v6e:2x2x1
jax: 0.10.0
libtpu: 0.0.40
codegen_flags: <defaults>
</compile_context>

<pallas_src>
import functools

import jax
import jax.numpy as jnp
from jax import lax
from jax.experimental import pallas as pl
from jax.experimental.pallas import tpu as pltpu

_VMEM_LIMIT = 64 * 1024 * 1024


def _round_up(x, m):
    return ((x + m - 1) // m) * m


# ---------------------------------------------------------------------------
# Tiled matmul kernels (f32 accumulator, pl.when init/finalize)
# ---------------------------------------------------------------------------
def _matmul_kernel(x_ref, w_ref, o_ref, acc_ref):
    @pl.when(pl.program_id(2) == 0)
    def _():
        acc_ref[...] = jnp.zeros_like(acc_ref)

    acc_ref[...] += jnp.dot(x_ref[...], w_ref[...],
                            preferred_element_type=jnp.float32)

    @pl.when(pl.program_id(2) == pl.num_programs(2) - 1)
    def _():
        o_ref[...] = acc_ref[...].astype(o_ref.dtype)


def _matmul_bias_kernel(x_ref, w_ref, b_ref, o_ref, acc_ref):
    @pl.when(pl.program_id(2) == 0)
    def _():
        acc_ref[...] = jnp.zeros_like(acc_ref)

    acc_ref[...] += jnp.dot(x_ref[...], w_ref[...],
                            preferred_element_type=jnp.float32)

    @pl.when(pl.program_id(2) == pl.num_programs(2) - 1)
    def _():
        # bias fused into the finalize (broadcast (1, tn) -> (tm, tn) on VPU)
        o_ref[...] = (acc_ref[...] + b_ref[...]).astype(o_ref.dtype)


def _pick_tile(dim, target, gran):
    """Largest multiple of `gran` <= target that divides `dim`; else full dim.

    Falling back to the full dim (instead of shrinking to `gran`) avoids
    degenerate tiles; N/K here are weight dims (ViT sizes are 128-friendly).
    """
    if dim <= target:
        return dim
    t = (target // gran) * gran
    while t >= gran:
        if dim % t == 0:
            return t
        t -= gran
    return dim


def _pick_tile_m(M, target):
    """Return (tm, M_pad) for the bf16 row (sublane) dimension.

    Prefer an exact multiple-of-16 divisor of M; otherwise pad M up to a
    fixed tile instead of collapsing tm to a degenerate size.
    """
    if M <= target:
        t = _round_up(M, 16)
        return t, t
    t = (target // 16) * 16
    while t >= 128:
        if M % t == 0:
            return t, M
        t -= 16
    t = min(target, 256)            # bounded-waste padding fallback
    return t, _round_up(M, t)


def _pallas_matmul(x, w, bias=None, *, out_dtype=jnp.float32,
                   tm=512, tn=512, tk=512):
    """x: (M, K) bf16, w: (K, N) bf16, optional bias: (N,) f32 -> (M, N)."""
    M, K = x.shape
    K2, N = w.shape
    assert K == K2
    tm, M_pad = _pick_tile_m(M, tm)
    if M_pad != M:
        x = jnp.pad(x, ((0, M_pad - M), (0, 0)))
    tn = _pick_tile(N, tn, 128)
    tk = _pick_tile(K, tk, 128)
    grid = (M_pad // tm, N // tn, K // tk)

    in_specs = [pl.BlockSpec((tm, tk), lambda i, j, k: (i, k)),
                pl.BlockSpec((tk, tn), lambda i, j, k: (k, j))]
    args = [x, w]
    if bias is not None:
        in_specs.append(pl.BlockSpec((1, tn), lambda i, j, k: (0, j)))
        args.append(bias.reshape(1, N).astype(jnp.float32))
        kernel = _matmul_bias_kernel
    else:
        kernel = _matmul_kernel

    out = pl.pallas_call(
        kernel,
        out_shape=jax.ShapeDtypeStruct((M_pad, N), out_dtype),
        grid=grid,
        in_specs=in_specs,
        out_specs=pl.BlockSpec((tm, tn), lambda i, j, k: (i, j)),
        scratch_shapes=[pltpu.VMEM((tm, tn), jnp.float32)],
        compiler_params=pltpu.CompilerParams(
            dimension_semantics=("parallel", "parallel", "arbitrary"),
            vmem_limit_bytes=_VMEM_LIMIT),
    )(*args)
    return out[:M] if M_pad != M else out


# ---------------------------------------------------------------------------
# Fused attention kernel: one (batch, head) pair per grid step
# ---------------------------------------------------------------------------
def _attention_kernel(qkv_ref, o_ref, *, scale, l_valid):
    # qkv_ref block: (3, 1, 1, l_pad, dh) bf16 -> q/k/v planes via static idx.
    q = qkv_ref[0, 0, 0] * scale         # scale folded into the (l, dh) q tile
    k = qkv_ref[1, 0, 0]
    v = qkv_ref[2, 0, 0]

    # scores: contract last axes directly (no explicit k.T / XLU transpose)
    s = lax.dot_general(q, k, (((1,), (1,)), ((), ())),
                        preferred_element_type=jnp.float32)   # (l_pad, l_pad)

    l_pad = s.shape[-1]
    if l_valid < l_pad:                  # mask padded keys (static condition)
        col = lax.broadcasted_iota(jnp.int32, s.shape, 1)
        s = jnp.where(col < l_valid, s, -1e30)

    # softmax stats in f32; normalization deferred to the (l, dh) result
    m = jnp.max(s, axis=-1, keepdims=True)
    p = jnp.exp(s - m)
    denom = jnp.sum(p, axis=-1, keepdims=True)

    z = jnp.dot(p.astype(v.dtype), v,
                preferred_element_type=jnp.float32)           # (l_pad, dh) f32
    z = z * pl.reciprocal(denom, approx=True)                 # EUP slot
    o_ref[0, 0] = z.astype(o_ref.dtype)                       # per-head store


def _pallas_attention(qkv, l_valid, scale):
    """qkv: (3, b, h, l_pad, dh) bf16 -> (b, h, l_pad, dh) bf16."""
    _, b, h, l_pad, dh = qkv.shape
    kernel = functools.partial(_attention_kernel, scale=scale, l_valid=l_valid)
    return pl.pallas_call(
        kernel,
        out_shape=jax.ShapeDtypeStruct((b, h, l_pad, dh), jnp.bfloat16),
        grid=(b, h),
        in_specs=[pl.BlockSpec((3, 1, 1, l_pad, dh),
                               lambda bi, hi: (0, bi, hi, 0, 0))],
        out_specs=pl.BlockSpec((1, 1, l_pad, dh),
                               lambda bi, hi: (bi, hi, 0, 0)),
        compiler_params=pltpu.CompilerParams(
            dimension_semantics=("parallel", "parallel"),
            vmem_limit_bytes=_VMEM_LIMIT),
    )(qkv)


def _pad_seq_len(l):
    """Pad l for lane density: multiple of 128 for ViT-style l, 16 for tiny l."""
    if l % 128 == 0:
        return l
    return _round_up(l, 128) if l > 64 else _round_up(l, 16)


# ---------------------------------------------------------------------------
# SelfAttention module (forward only)
# ---------------------------------------------------------------------------
class SelfAttention:
    def __init__(self, dim, num_heads=8, dim_per_head=64, dropout=0.0, *,
                 key=None):
        self.num_heads = num_heads
        self.dim_per_head = dim_per_head
        self.scale = dim_per_head ** (-0.5)
        inner_dim = dim_per_head * num_heads
        self.inner_dim = inner_dim
        self.dim = dim
        self.project_out = not (num_heads == 1 and dim_per_head == dim)

        if key is None:
            key = jax.random.PRNGKey(0)
        k1, k2, k3 = jax.random.split(key, 3)

        # nn.Linear(dim, inner_dim*3, bias=False): weight (3*inner, dim)
        bound_qkv = 1.0 / jnp.sqrt(dim)
        self.w_qkv = jax.random.uniform(
            k1, (inner_dim * 3, dim), jnp.float32, -bound_qkv, bound_qkv)
        self.w_qkv_t = self.w_qkv.T.astype(jnp.bfloat16)       # (dim, 3*inner)

        if self.project_out:
            # nn.Linear(inner_dim, dim): weight (dim, inner_dim), bias (dim,)
            bound_out = 1.0 / jnp.sqrt(inner_dim)
            self.w_out = jax.random.uniform(
                k2, (dim, inner_dim), jnp.float32, -bound_out, bound_out)
            self.b_out = jax.random.uniform(
                k3, (dim,), jnp.float32, -bound_out, bound_out)
            self.w_out_t = self.w_out.T.astype(jnp.bfloat16)    # (inner, dim)
        else:
            self.w_out = None
            self.b_out = None
            self.w_out_t = None

    def __call__(self, x):
        b, l, d = x.shape
        h, dh = self.num_heads, self.dim_per_head
        inner = self.inner_dim

        l_pad = _pad_seq_len(l)
        x_bf = x.astype(jnp.bfloat16)
        if l_pad != l:
            x_bf = jnp.pad(x_bf, ((0, 0), (0, l_pad - l), (0, 0)))

        # i. QKV projection (tiled Pallas matmul, bf16 operands, f32 acc)
        qkv = _pallas_matmul(x_bf.reshape(b * l_pad, d), self.w_qkv_t,
                             out_dtype=jnp.bfloat16)        # (b*l_pad, 3*inner)

        # Split into per-(q/k/v, head) planes (same permute as the torch ref)
        # so each grid step gets an aligned (l_pad, dh) tile via BlockSpec DMA.
        qkv = qkv.reshape(b, l_pad, 3, h, dh).transpose(2, 0, 3, 1, 4)

        # ii./iii. fused per-(batch, head) attention
        z = _pallas_attention(qkv, l, self.scale)            # (b, h, l_pad, dh)
        z = z.transpose(0, 2, 1, 3).reshape(b * l_pad, inner)

        # iv. output projection (+ fused bias)
        if self.project_out:
            out = _pallas_matmul(z, self.w_out_t, bias=self.b_out,
                                 out_dtype=jnp.float32)
            out = out.reshape(b, l_pad, d)
            return out[:, :l] if l_pad != l else out
        z = z.reshape(b, l_pad, inner).astype(jnp.float32)
        return z[:, :l] if l_pad != l else z


# ---------------------------------------------------------------------------
# Reference (plain jnp, f32) for sanity checking
# ---------------------------------------------------------------------------
def _reference_forward(module, x):
    b, l, d = x.shape
    h, dh = module.num_heads, module.dim_per_head
    qkv = x @ module.w_qkv.T
    qkv = qkv.reshape(b, l, 3, h, dh).transpose(2, 0, 3, 1, 4)
    q, k, v = qkv[0], qkv[1], qkv[2]
    s = jnp.einsum("bhqd,bhkd->bhqk", q, k) * module.scale
    p = jax.nn.softmax(s, axis=-1)
    z = jnp.einsum("bhqk,bhkd->bhqd", p, v)
    z = z.transpose(0, 2, 1, 3).reshape(b, l, h * dh)
    if module.project_out:
        return z @ module.w_out.T + module.b_out
    return z


if __name__ == "__main__":
    key = jax.random.PRNGKey(0)
    kx, kp = jax.random.split(key)

    # Small shapes consistent with the module's forward: x is (b, l, dim)
    b, l, dim = 2, 8, 32
    num_heads, dim_per_head = 4, 16

    x = jax.random.normal(kx, (b, l, dim), dtype=jnp.float32)
    attn = SelfAttention(dim, num_heads=num_heads, dim_per_head=dim_per_head,
                         dropout=0.0, key=kp)

    out = attn(x)
    out = jax.block_until_ready(out)

    ref = _reference_forward(attn, x)
    assert out.shape == (b, l, dim)
    # bf16 MXU operands + approx reciprocal -> slightly looser tolerance
    assert jnp.allclose(out, ref, atol=2e-2, rtol=2e-2)

    print("KERNEL_OK")
</pallas_src>

<mosaic_0001>
module attributes {stable_mosaic.version = 11 : i64} {
  func.func @_matmul_kernel(%arg0: i32, %arg1: i32, %arg2: i32, %arg3: memref<32x32xbf16, #tpu.memory_space<vmem>>, %arg4: memref<32x192xbf16, #tpu.memory_space<vmem>>, %arg5: memref<32x192xbf16, #tpu.memory_space<vmem>>, %arg6: memref<32x192xf32, #tpu.memory_space<vmem>>) attributes {dimension_semantics = [#tpu.dimension_semantics<parallel>, #tpu.dimension_semantics<parallel>, #tpu.dimension_semantics<arbitrary>], iteration_bounds = array<i64: 1, 1, 1>, scalar_prefetch = 0 : i64, scratch_operands = 1 : i64, tpu.core_type = #tpu.core_type<tc>, window_params = [{transform_indices = @transform_0, window_bounds = array<i64: 32, 32>}, {transform_indices = @transform_1, window_bounds = array<i64: 32, 192>}, {transform_indices = @transform_2, window_bounds = array<i64: 32, 192>}]} {
    %c0_i32 = arith.constant 0 : i32
    %0 = arith.cmpi eq, %arg2, %c0_i32 : i32
    %1 = arith.extui %0 : i1 to i32
    %c0_i32_0 = arith.constant 0 : i32
    %2 = arith.cmpi ne, %1, %c0_i32_0 : i32
    scf.if %2 {
      %cst_10 = arith.constant 0.000000e+00 : f32
      %12 = vector.broadcast %cst_10 : f32 to vector<32x192xf32>
      %c0_11 = arith.constant 0 : index
      %c0_12 = arith.constant 0 : index
      %13 = vector.load %arg6[%c0_11, %c0_12] : memref<32x192xf32, #tpu.memory_space<vmem>>, vector<32x192xf32>
      tpu.vector_store %arg6[%c0_11, %c0_12], %12 {strides = array<i32>} : memref<32x192xf32, #tpu.memory_space<vmem>>, vector<32x192xf32>,
    } else {
    }
    %c0 = arith.constant 0 : index
    %c0_1 = arith.constant 0 : index
    %3 = vector.load %arg6[%c0, %c0_1] : memref<32x192xf32, #tpu.memory_space<vmem>>, vector<32x192xf32>
    %c0_2 = arith.constant 0 : index
    %c0_3 = arith.constant 0 : index
    %4 = vector.load %arg3[%c0_2, %c0_3] : memref<32x32xbf16, #tpu.memory_space<vmem>>, vector<32x32xbf16>
    %c0_4 = arith.constant 0 : index
    %c0_5 = arith.constant 0 : index
    %5 = vector.load %arg4[%c0_4, %c0_5] : memref<32x192xbf16, #tpu.memory_space<vmem>>, vector<32x192xbf16>
    %cst = arith.constant dense<0.000000e+00> : vector<32x192xf32>
    %6 = tpu.matmul %4, %5, %cst {dimension_numbers = #tpu.dot_dimension_numbers<[1], [0], [0], [1], [0, 0, 1, 1], [], []>} : vector<32x32xbf16>, vector<32x192xbf16>, vector<32x192xf32> -> vector<32x192xf32>
    %7 = arith.addf %3, %6 : vector<32x192xf32>
    %c0_6 = arith.constant 0 : index
    %c0_7 = arith.constant 0 : index
    %8 = vector.load %arg6[%c0_6, %c0_7] : memref<32x192xf32, #tpu.memory_space<vmem>>, vector<32x192xf32>
    tpu.vector_store %arg6[%c0_6, %c0_7], %7 {strides = array<i32>} : memref<32x192xf32, #tpu.memory_space<vmem>>, vector<32x192xf32>,
    %c0_i32_8 = arith.constant 0 : i32
    %9 = arith.cmpi eq, %arg2, %c0_i32_8 : i32
    %10 = arith.extui %9 : i1 to i32
    %c0_i32_9 = arith.constant 0 : i32
    %11 = arith.cmpi ne, %10, %c0_i32_9 : i32
    scf.if %11 {
      %c0_10 = arith.constant 0 : index
      %c0_11 = arith.constant 0 : index
      %12 = vector.load %arg6[%c0_10, %c0_11] : memref<32x192xf32, #tpu.memory_space<vmem>>, vector<32x192xf32>
      %13 = arith.truncf %12 : vector<32x192xf32> to vector<32x192xbf16>
      %c0_12 = arith.constant 0 : index
      %c0_13 = arith.constant 0 : index
      %14 = vector.load %arg5[%c0_12, %c0_13] : memref<32x192xbf16, #tpu.memory_space<vmem>>, vector<32x192xbf16>
      tpu.vector_store %arg5[%c0_12, %c0_13], %13 {strides = array<i32>} : memref<32x192xbf16, #tpu.memory_space<vmem>>, vector<32x192xbf16>,
    } else {
    }
    return
  }
  func.func @transform_0(%arg0: i32, %arg1: i32, %arg2: i32) -> (i32, i32) {
    %c0_i32 = arith.constant 0 : i32
    return %arg0, %arg2 : i32, i32
  }
  func.func @transform_1(%arg0: i32, %arg1: i32, %arg2: i32) -> (i32, i32) {
    %c0_i32 = arith.constant 0 : i32
    return %arg2, %arg1 : i32, i32
  }
  func.func @transform_2(%arg0: i32, %arg1: i32, %arg2: i32) -> (i32, i32) {
    %c0_i32 = arith.constant 0 : i32
    return %arg0, %arg1 : i32, i32
  }
}

</mosaic_0001>

<llo_original>
// kernel: tpu_custom_call.1
$region0: #{tpu_custom_call.1}
  #allocation0 [shape = 'u32[]', space=smem, size = 0x4, offset = 0x4, fixed_abs, tag = 'smem constant byte address 0x4 - core index']
  #allocation1 [shape = 'u32[144,128]{1,0:T(1,128)}', space=vmem, size = 0x12000, scoped, tag = 'internal scratch']
  #allocation2 [shape = 'f32[32,192]{1,0:T(8,128)}', space=vmem, size = 0x8000, scoped, tag = 'scratch operand']
  %s0 = inlined_call_operand.hbm [shape: bf16[32,32], index: 0, kind: input, shape index: {}]
  %s1 = inlined_call_operand.hbm [shape: bf16[32,192], index: 1, kind: input, shape index: {}]
  %s2 = inlined_call_operand.hbm [shape: bf16[32,192], index: 2, kind: output, shape index: {}]
  %s3 = sld [smem:[#allocation0]]
  $region34: #{tpu_custom_call.1} parent=0
    _
  %s5 = ssub.s32 1, %s3
  %s6 = scalar_select 0, %s5, %s3
  $region1: #{tpu_custom_call.1} parent=0
    #allocation3 [shape = 'u8[8192]{0}', space=vmem, size = 0x2000, scoped, tag = 'input window, operand 0, single buffered']
    #allocation4 [shape = 's32[1]{0}', space=sflag, size = 0x4, scoped, tag = 'scoped memory for tpu_custom_call.1']
    #allocation5 [shape = 's32[1]{0}', space=sflag, size = 0x4, scoped, tag = 'scoped memory for tpu_custom_call.1']
    #allocation6 [shape = 'u8[16384]{0}', space=vmem, size = 0x4000, scoped, tag = 'input window, operand 1, single buffered']
    #allocation7 [shape = 's32[1]{0}', space=sflag, size = 0x4, scoped, tag = 'scoped memory for tpu_custom_call.1']
    #allocation8 [shape = 'u8[16384]{0}', space=vmem, size = 0x4000, scoped, tag = 'output window, operand 0, single buffered']
    %7 = vsyncpa [#allocation4], 0
    %8 = vsyncpa [#allocation7], 0
    %9 = vsyncpa [#allocation5], 0
    // Predicated region
    $region2: #{tpu_custom_call.1} parent=1 // pred_check
      _
    $region3: #{tpu_custom_call.1} parent=1 // pred_check_branch
      %11 = sbr.rel (0) target = $region5
    $region4: #{tpu_custom_call.1} parent=1 // pred_region
      %s13 = ssub.s32 256, 256
      %14 = vsyncadd [#allocation4], %s13
      %s15 = sshll.u32 [#allocation3], 4
      %s16 = int_to_ptr.vmem [resolvable:$true] %s15
      %21 = dma.hbm_to_vmem [thread:$0]  %s0, 256, %s16, [#allocation4], 64, 64, 4
    $region5: #{tpu_custom_call.1} parent=1 // pred_fallthru
      _
    // Predicated region
    $region6: #{tpu_custom_call.1} parent=1 // pred_check
      _
    $region7: #{tpu_custom_call.1} parent=1 // pred_check_branch
      %23 = sbr.rel (0) target = $region9
    $region8: #{tpu_custom_call.1} parent=1 // pred_region
      %s25 = ssub.s32 512, 512
      %26 = vsyncadd [#allocation7], %s25
      %s27 = sshll.u32 [#allocation6], 4
      %s28 = int_to_ptr.vmem [resolvable:$true] %s27
      %33 = dma.hbm_to_vmem [thread:$0]  %s1, 512, %s28, [#allocation7], 128, 128, 8
    $region9: #{tpu_custom_call.1} parent=1 // pred_fallthru
      _
    // Predicated region
    $region10: #{tpu_custom_call.1} parent=1 // pred_check
      _
    $region11: #{tpu_custom_call.1} parent=1 // pred_check_branch
      %35 = sbr.rel (0) target = $region13
    $region12: #{tpu_custom_call.1} parent=1 // pred_region
      %36 = dma.done [#allocation4], 256
    $region13: #{tpu_custom_call.1} parent=1 // pred_fallthru
      _
    // Predicated region
    $region14: #{tpu_custom_call.1} parent=1 // pred_check
      _
    $region15: #{tpu_custom_call.1} parent=1 // pred_check_branch
      %38 = sbr.rel (0) target = $region17
    $region16: #{tpu_custom_call.1} parent=1 // pred_region
      %39 = dma.done [#allocation7], 512
    $region17: #{tpu_custom_call.1} parent=1 // pred_fallthru
      _
    %p41 = scmp.eq.s32.totalorder 0, 0
    // Predicated region
    $region18: #{tpu_custom_call.1} parent=1 // pred_check
      %p42 = pneg %p41
    $region19: #{tpu_custom_call.1} parent=1 // pred_check_branch
      %44 = sbr.rel (%p42) target = $region21
    $region20: #{tpu_custom_call.1} parent=1 // pred_region
      %45 = vst [vmem:[#allocation2] sm:$0xff] 0.0
      %vm46 = vcmask 523264
      %47 = vst.msk [vmem:[#allocation2 + $0x8] sm:$0xff] %vm46, 0.0
      %48 = vst [vmem:[#allocation2 + $0x10] sm:$0xff] 0.0
      %49 = vst.msk [vmem:[#allocation2 + $0x18] sm:$0xff] %vm46, 0.0
      %50 = vst [vmem:[#allocation2 + $0x20] sm:$0xff] 0.0
      %51 = vst.msk [vmem:[#allocation2 + $0x28] sm:$0xff] %vm46, 0.0
      %52 = vst [vmem:[#allocation2 + $0x30] sm:$0xff] 0.0
      %53 = vst.msk [vmem:[#allocation2 + $0x38] sm:$0xff] %vm46, 0.0
    $region21: #{tpu_custom_call.1} parent=1 // pred_fallthru
      _
    %v54 = vld [vmem:[#allocation2] sm:$0xff]
    %v55 = vld [vmem:[#allocation2 + $0x8] sm:$0xff]
    %v56 = vld [vmem:[#allocation2 + $0x10] sm:$0xff]
    %v57 = vld [vmem:[#allocation2 + $0x18] sm:$0xff]
    %v58 = vld [vmem:[#allocation2 + $0x20] sm:$0xff]
    %v59 = vld [vmem:[#allocation2 + $0x28] sm:$0xff]
    %v60 = vld [vmem:[#allocation2 + $0x30] sm:$0xff]
    %v61 = vld [vmem:[#allocation2 + $0x38] sm:$0xff]
    %v62 = vld [vmem:[#allocation3] sm:$0xf]
    %v63 = vld [vmem:[#allocation3 + $0x4] sm:$0xf]
    %v64 = vld [vmem:[#allocation3 + $0x8] sm:$0xf]
    %v65 = vld [vmem:[#allocation3 + $0xc] sm:$0xf]
    %v66 = vld [vmem:[#allocation6] sm:$0xff]
    %v67 = vld [vmem:[#allocation6 + $0x8] sm:$0xff]
    %v68 = vld [vmem:[#allocation6 + $0x10] sm:$0xff]
    %v69 = vld [vmem:[#allocation6 + $0x18] sm:$0xff]
    %v74 = vunpack.c.l.b16 %v62
    %v75 = vunpack.c.l.b16 %v63
    %v76 = vunpack.c.l.b16 %v64
    %v77 = vunpack.c.l.b16 %v65
    %v78 = vpack.c.b16 %v75, %v74
    %v79 = vpack.c.b16 %v77, %v76
    %v84 = vunpack.c.l.b16 %v66
    %v85 = vunpack.c.h.b16 %v66
    %v86 = vunpack.c.l.b16 %v67
    %v87 = vunpack.c.h.b16 %v67
    %v88 = vunpack.c.l.b16 %v68
    %v89 = vunpack.c.h.b16 %v68
    %v90 = vunpack.c.l.b16 %v69
    %v91 = vunpack.c.h.b16 %v69
    %v92 = vpack.c.b16 %v86, %v84
    %v93 = vpack.c.b16 %v87, %v85
    %v94 = vpack.c.b16 %v90, %v88
    %v95 = vpack.c.b16 %v91, %v89
    %vm100 = vcmask 261120
    %v102 = vsel %vm100, %v78, 0
    %v105 = vsel %vm100, %v79, 0
    %107 = vmatprep.subr.bf16.mxu0 0
    %108 = vmatpush1.bf16.msra.mxu0 0
    %109 = vmatprep.subr.bf16.mxu0 0
    %110 = vmatpush1.bf16.msra.mxu0 0
    %111 = vmatprep.subr.bf16.mxu0 0
    %112 = vmatpush1.bf16.msra.mxu0 0
    %113 = vmatprep.subr.bf16.mxu0 0
    %114 = vmatpush1.bf16.msra.mxu0 0
    %115 = vmatprep.subr.bf16.mxu0 0
    %116 = vmatpush1.bf16.msra.mxu0 0
    %117 = vmatprep.subr.bf16.mxu0 0
    %118 = vmatpush1.bf16.msra.mxu0 0
    %119 = vmatprep.subr.bf16.mxu0 %v95
    %120 = vmatpush1.bf16.msra.mxu0 %v94
    %121 = vmatprep.subr.bf16.mxu0 %v93
    %122 = vmatpush1.bf16.msra.mxu0 %v92
    %123 = vmatprep.subr.bf16.mxu0 0
    %124 = vmatpush2.bf16.msra.mxu0 0
    %125 = vmatprep.subr.bf16.mxu0 0
    %126 = vmatpush2.bf16.msra.mxu0 0
    %127 = vmatprep.subr.bf16.mxu0 0
    %128 = vmatpush2.bf16.msra.mxu0 0
    %129 = vmatprep.subr.bf16.mxu0 0
    %130 = vmatpush2.bf16.msra.mxu0 0
    %131 = vmatprep.subr.bf16.mxu0 0
    %132 = vmatpush2.bf16.msra.mxu0 0
    %133 = vmatprep.subr.bf16.mxu0 0
    %134 = vmatpush2.bf16.msra.mxu0 0
    %135 = vmatprep.subr.bf16.mxu0 0
    %136 = vmatpush2.bf16.msra.mxu0 0
    %137 = vmatprep.subr.bf16.mxu0 0
    %138 = vmatpush2.bf16.msra.mxu0 0
    %139 = vmatprep.mubr.bf16.mxu0 0
    %140 = vmatmul.mubr.bf16.gmra.mxu0 %v102
    %v141 = vpop.f32.mrf.mxu0
    %v142 = vadd.f32 0.0, %v141
    %v143 = vpop.f32.mrf.mxu0
    %v144 = vadd.f32 0.0, %v143
    %v145 = vpop.f32.mrf.mxu0
    %v146 = vadd.f32 0.0, %v145
    %v147 = vpop.f32.mrf.mxu0
    %v148 = vadd.f32 0.0, %v147
    %149 = vmatprep.mubr.bf16.mxu0 0
    %150 = vmatmul.mubr.bf16.gmra.mxu0 %v105
    %v151 = vpop.f32.mrf.mxu0
    %v152 = vadd.f32 0.0, %v151
    %v153 = vpop.f32.mrf.mxu0
    %v154 = vadd.f32 0.0, %v153
    %v155 = vpop.f32.mrf.mxu0
    %v156 = vadd.f32 0.0, %v155
    %v157 = vpop.f32.mrf.mxu0
    %v158 = vadd.f32 0.0, %v157
    %159 = vdwg.mxu0
    %v160 = vadd.f32 %v54, %v142
    %v161 = vadd.f32 %v55, %v144
    %v162 = vadd.f32 %v56, %v146
    %v163 = vadd.f32 %v57, %v148
    %v164 = vadd.f32 %v58, %v152
    %v165 = vadd.f32 %v59, %v154
    %v166 = vadd.f32 %v60, %v156
    %v167 = vadd.f32 %v61, %v158
    %168 = vst [vmem:[#allocation2] sm:$0xff] %v160
    %vm169 = vcmask 523264
    %170 = vst.msk [vmem:[#allocation2 + $0x8] sm:$0xff] %vm169, %v161
    %171 = vst [vmem:[#allocation2 + $0x10] sm:$0xff] %v162
    %172 = vst.msk [vmem:[#allocation2 + $0x18] sm:$0xff] %vm169, %v163
    %173 = vst [vmem:[#allocation2 + $0x20] sm:$0xff] %v164
    %174 = vst.msk [vmem:[#allocation2 + $0x28] sm:$0xff] %vm169, %v165
    %175 = vst [vmem:[#allocation2 + $0x30] sm:$0xff] %v166
    %176 = vst.msk [vmem:[#allocation2 + $0x38] sm:$0xff] %vm169, %v167
    // Predicated region
    $region22: #{tpu_custom_call.1} parent=1 // pred_check
      %p177 = pneg %p41
    $region23: #{tpu_custom_call.1} parent=1 // pred_check_branch
      %179 = sbr.rel (%p177) target = $region25
    $region24: #{tpu_custom_call.1} parent=1 // pred_region
      %v180 = vld [vmem:[#allocation2] sm:$0xff]
      %v181 = vld [vmem:[#allocation2 + $0x8] sm:$0xff]
      %v182 = vld [vmem:[#allocation2 + $0x10] sm:$0xff]
      %v183 = vld [vmem:[#allocation2 + $0x18] sm:$0xff]
      %v184 = vld [vmem:[#allocation2 + $0x20] sm:$0xff]
      %v185 = vld [vmem:[#allocation2 + $0x28] sm:$0xff]
      %v186 = vld [vmem:[#allocation2 + $0x30] sm:$0xff]
      %v187 = vld [vmem:[#allocation2 + $0x38] sm:$0xff]
      %v188 = vpack.c.bf16 %v182, %v180
      %v189 = vpack.c.bf16 %v183, %v181
      %v190 = vpack.c.bf16 %v186, %v184
      %v191 = vpack.c.bf16 %v187, %v185
      %v196 = vunpack.c.l.b16 %v188
      %v197 = vunpack.c.l.b16 %v189
      %v198 = vunpack.c.h.b16 %v188
      %v199 = vunpack.c.h.b16 %v189
      %v200 = vunpack.c.l.b16 %v190
      %v201 = vunpack.c.l.b16 %v191
      %v202 = vunpack.c.h.b16 %v190
      %v203 = vunpack.c.h.b16 %v191
      %v204 = vpack.c.b16 %v197, %v196
      %v205 = vpack.c.b16 %v199, %v198
      %v206 = vpack.c.b16 %v201, %v200
      %v207 = vpack.c.b16 %v203, %v202
      %vm212 = vcmask 1043456
      %vm213 = vcmask 523268
      %vm214 = vmor %vm213, %vm212
      %215 = vst.msk [vmem:[#allocation8] sm:$0xff] %vm214, %v204
      %216 = vst.msk [vmem:[#allocation8 + $0x8] sm:$0xff] %vm214, %v205
      %217 = vst.msk [vmem:[#allocation8 + $0x10] sm:$0xff] %vm214, %v206
      %218 = vst.msk [vmem:[#allocation8 + $0x18] sm:$0xff] %vm214, %v207
    $region25: #{tpu_custom_call.1} parent=1 // pred_fallthru
      _
    // Predicated region
    $region26: #{tpu_custom_call.1} parent=1 // pred_check
      _
    $region27: #{tpu_custom_call.1} parent=1 // pred_check_branch
      %220 = sbr.rel (0) target = $region29
    $region28: #{tpu_custom_call.1} parent=1 // pred_region
      %s222 = ssub.s32 512, 512
      %223 = vsyncadd [#allocation5], %s222
      %s224 = sshll.u32 [#allocation8], 4
      %s225 = int_to_ptr.vmem [resolvable:$true] %s224
      %230 = dma.vmem_to_hbm [thread:$0]  %s225, 512, %s2, [#allocation5], 128, 128, 8
    $region29: #{tpu_custom_call.1} parent=1 // pred_fallthru
      _
    // Predicated region
    $region30: #{tpu_custom_call.1} parent=1 // pred_check
      _
    $region31: #{tpu_custom_call.1} parent=1 // pred_check_branch
      %232 = sbr.rel (0) target = $region33
    $region32: #{tpu_custom_call.1} parent=1 // pred_region
      %233 = dma.done [#allocation5], 512
    $region33: #{tpu_custom_call.1} parent=1 // pred_fallthru
      _
    %234 = vsyncpa [#allocation4], 1
    %235 = vsyncpa [#allocation7], 1
    %236 = vsyncpa [#allocation5], 1

</llo_original>
